<compile_context>
chip_gen: v5e
topology: v5e:2x2
jax: 0.10.0
libtpu: 0.0.40
codegen_flags: <defaults>
</compile_context>

<pallas_src>
import functools

import jax
import jax.numpy as jnp
from jax.experimental import pallas as pl
from jax.experimental.pallas import tpu as pltpu


def _pick_row_tile(OH, OW, target_rows=512):
    """Largest TOH dividing OH with (TOH*OW) % 8 == 0 (or TOH == OH), sized so
    TOH*OW is roughly `target_rows` (amortizes per-step pipeline overhead while
    keeping the accumulator small)."""
    cap = max(1, target_rows // max(OW, 1))
    candidates = [t for t in range(1, OH + 1)
                  if OH % t == 0 and ((t * OW) % 8 == 0 or t == OH)]
    small = [t for t in candidates if t <= cap]
    return max(small) if small else min(candidates)


# ----------------------------- Pallas kernel --------------------------------
def _conv_bn_relu6_kernel(x_ref, w_ref, b_ref, o_ref, patch_ref, *,
                          KH, KW, stride, TOH, OW, Cin, Cout):
    # x_ref:     (s*s, Hph, Wph, Cin)  bf16 stride-phase stack of one padded image
    #                                  (index map depends only on n -> resident
    #                                   across the row-tile grid axis)
    # w_ref:     (KH*KW*Cin, Cout_pad) bf16 BN-folded weights packed for one big-K dot
    # b_ref:     (1, Cout_pad)         f32 folded BN bias
    # o_ref:     (TOH*OW, Cout)        bf16 output rows of this tile (true Cout only)
    # patch_ref: (TOH*OW, KH*KW*Cin)   bf16 VMEM scratch: in-VMEM im2col of this tile
    s = stride
    r = pl.program_id(1)
    oh0 = pl.multiple_of(r * TOH, TOH)

    # In-VMEM im2col: gather the KH*KW taps of this row tile into one contiguous
    # (rows, big-K) block.  Statically unrolled; all W offsets are Python ints,
    # the H offset is the (dynamic) row-tile start.
    for kh in range(KH):
        qh, ph = kh // s, kh % s
        for kw in range(KW):
            qw, pw = kw // s, kw % s
            tap = kh * KW + kw
            piece = x_ref[ph * s + pw, pl.ds(oh0 + qh, TOH), qw:qw + OW, :]
            patch_ref[:, tap * Cin:(tap + 1) * Cin] = piece.reshape(TOH * OW, Cin)

    # ONE big-K MXU matmul (K = KH*KW*Cin) with f32 accumulation.
    acc = jnp.dot(patch_ref[...], w_ref[...], preferred_element_type=jnp.float32)

    # f32 epilogue on the accumulator (bias + ReLU6), cast only at the store;
    # only the true Cout channels are ever written to HBM.
    y = jnp.clip(acc + b_ref[...], 0.0, 6.0)
    o_ref[...] = y[:, :Cout].astype(o_ref.dtype)


# ------------------------------- wrapper -------------------------------------
@functools.partial(jax.jit, static_argnames=("kernel", "stride", "padding"))
def conv_bn_relu6(x, weight, gamma, beta, running_mean, running_var,
                  *, kernel=3, stride=2, padding=1, eps=1e-5):
    """Equivalent of _conv_bn(inp, oup, kernel, stride).forward(x) in eval mode.

    x:      (N, Cin, H, W)    NCHW, like PyTorch
    weight: (Cout, Cin, KH, KW)
    returns (N, Cout, OH, OW)  (bf16)
    """
    N, Cin, H, W = x.shape
    Cout = weight.shape[0]
    KH = KW = kernel
    s = stride
    HP, WP = H + 2 * padding, W + 2 * padding
    OH = (HP - KH) // s + 1
    OW = (WP - KW) // s + 1
    qh_max, qw_max = (KH - 1) // s, (KW - 1) // s
    Hph, Wph = OH + qh_max, OW + qw_max              # per-phase spatial extents
    K2 = KH * KW
    Cout_pad = ((Cout + 127) // 128) * 128           # matmul N dim only (never hits HBM)
    TOH = _pick_row_tile(OH, OW)
    R = OH // TOH

    # Fold inference-mode BatchNorm: scale into the weights, bias kept separate.
    # TODO(synk): training-mode BN (batch statistics + running-stat update) not implemented.
    scale = gamma / jnp.sqrt(running_var + eps)                       # (Cout,)
    bias = beta - running_mean * scale                                # (Cout,)
    w_scaled = weight * scale[:, None, None, None]                    # (Cout,Cin,KH,KW)
    # Pack as one big-K matrix; row index = (kh*KW + kw)*Cin + c matches kernel im2col.
    w_big = jnp.transpose(w_scaled, (2, 3, 1, 0)).reshape(K2 * Cin, Cout)
    w_big = jnp.pad(w_big, ((0, 0), (0, Cout_pad - Cout))).astype(jnp.bfloat16)
    bias_pad = jnp.pad(bias, (0, Cout_pad - Cout)).reshape(1, Cout_pad).astype(jnp.float32)

    # NCHW -> NHWC, spatial zero-pad, then stride-phase decomposition (one host pass,
    # same total size as the padded activation — NOT a KH*KW blow-up):
    #   x_ph[n, ph*s+pw, h', w', c] = x_pad[n, h'*s+ph, w'*s+pw, c]
    # TODO(synk): keep the network NHWC end-to-end / do this gather with in-kernel DMA
    #             from an HBM ref to remove the host-side layout pass entirely.
    xh = jnp.transpose(x, (0, 2, 3, 1))
    xp = jnp.pad(xh, ((0, 0), (padding, padding), (padding, padding), (0, 0)))
    th, tw = s * Hph, s * Wph
    xp = jnp.pad(xp, ((0, 0), (0, max(0, th - HP)), (0, max(0, tw - WP)), (0, 0)))
    xp = xp[:, :th, :tw, :]
    x_ph = xp.reshape(N, Hph, s, Wph, s, Cin).transpose(0, 2, 4, 1, 3, 5)
    x_ph = x_ph.reshape(N, s * s, Hph, Wph, Cin).astype(jnp.bfloat16)

    kern = functools.partial(_conv_bn_relu6_kernel, KH=KH, KW=KW, stride=s,
                             TOH=TOH, OW=OW, Cin=Cin, Cout=Cout)

    # VMEM limit derived from the actual per-step footprint (double-buffered I/O +
    # resident weights + scratch + f32 accumulator), generation-aware when possible.
    # TODO(synk): for very large images also tile the input H window instead of
    #             keeping the whole per-image phase stack resident.
    x_blk = s * s * Hph * Wph * Cin * 2
    w_blk = K2 * Cin * Cout_pad * 2 + Cout_pad * 4
    o_blk = TOH * OW * Cout * 2
    patch_blk = TOH * OW * K2 * Cin * 2
    acc_blk = TOH * OW * Cout_pad * 4
    need = 2 * x_blk + 2 * o_blk + 2 * w_blk + patch_blk + 2 * acc_blk
    vmem_cap = 64 * 1024 * 1024
    try:
        vmem_cap = int(pltpu.get_tpu_info().vmem_capacity_bytes)
    except Exception:
        pass
    vmem_limit = int(min(max(32 * 1024 * 1024, 2 * need + 8 * 1024 * 1024),
                         vmem_cap - 4 * 1024 * 1024))

    out2d = pl.pallas_call(
        kern,
        out_shape=jax.ShapeDtypeStruct((N, OH * OW, Cout), jnp.bfloat16),
        grid_spec=pltpu.PrefetchScalarGridSpec(
            num_scalar_prefetch=0,
            grid=(N, R),                                   # (image, spatial row tile)
            in_specs=[
                # one image's phase stack; re-used (no re-DMA) across the row-tile axis
                pl.BlockSpec((None, s * s, Hph, Wph, Cin),
                             lambda n, r: (n, 0, 0, 0, 0)),
                # weights / bias resident across the whole grid
                pl.BlockSpec((K2 * Cin, Cout_pad), lambda n, r: (0, 0)),
                pl.BlockSpec((1, Cout_pad), lambda n, r: (0, 0)),
            ],
            out_specs=pl.BlockSpec((None, TOH * OW, Cout), lambda n, r: (n, r, 0)),
            scratch_shapes=[pltpu.VMEM((TOH * OW, K2 * Cin), jnp.bfloat16)],
        ),
        compiler_params=pltpu.CompilerParams(
            # every grid step is fully independent (no cross-step accumulator), so
            # both axes can be sharded across TensorCores (helps N=1 inference).
            dimension_semantics=("parallel", "parallel"),
            vmem_limit_bytes=vmem_limit,
        ),
    )(x_ph, w_big, bias_pad)

    # (N, OH*OW, Cout) -> (N, Cout, OH, OW); no channel-pad slice needed anymore.
    # TODO(synk): keep the network NHWC end-to-end to avoid this final transpose pass.
    out = out2d.reshape(N, OH, OW, Cout)
    return jnp.transpose(out, (0, 3, 1, 2))


# --------------------------------- main --------------------------------------
if __name__ == "__main__":
    key = jax.random.PRNGKey(0)
    N, Cin, H, W = 2, 4, 16, 16
    Cout, K, stride, pad = 8, 3, 2, 1

    k1, k2, k3, k4, k5 = jax.random.split(key, 5)
    x = jax.random.normal(k1, (N, Cin, H, W), dtype=jnp.float32)
    weight = jax.random.normal(k2, (Cout, Cin, K, K), dtype=jnp.float32) * 0.1
    gamma = jax.random.normal(k3, (Cout,), dtype=jnp.float32) * 0.1 + 1.0
    beta = jax.random.normal(k4, (Cout,), dtype=jnp.float32) * 0.1
    running_mean = jax.random.normal(k5, (Cout,), dtype=jnp.float32) * 0.1
    running_var = jnp.ones((Cout,), dtype=jnp.float32)

    out = conv_bn_relu6(x, weight, gamma, beta, running_mean, running_var,
                        kernel=K, stride=stride, padding=pad)
    out = jax.block_until_ready(out)
    assert out.shape == (N, Cout, H // stride, W // stride), out.shape

    # Reference with the SAME operand rounding the kernel uses (bf16 activations
    # and BN-scaled bf16 weights, f32 accumulation); kernel output is bf16, so
    # compare in f32 with a bf16-rounding-sized tolerance.
    eps = 1e-5
    scale = gamma / jnp.sqrt(running_var + eps)
    bias = beta - running_mean * scale
    w_ref = (weight * scale[:, None, None, None]).astype(jnp.bfloat16).astype(jnp.float32)
    x_ref = x.astype(jnp.bfloat16).astype(jnp.float32)
    conv_ref = jax.lax.conv_general_dilated(
        x_ref, w_ref, window_strides=(stride, stride),
        padding=((pad, pad), (pad, pad)),
        dimension_numbers=("NCHW", "OIHW", "NCHW"),
        preferred_element_type=jnp.float32)
    ref = jnp.clip(conv_ref + bias[None, :, None, None], 0.0, 6.0)

    out_f32 = out.astype(jnp.float32)
    max_err = float(jnp.max(jnp.abs(out_f32 - ref)))
    assert jnp.allclose(out_f32, ref, atol=5e-2, rtol=5e-2), max_err
    print("KERNEL_OK")
</pallas_src>

<mosaic_0001>
module attributes {stable_mosaic.version = 11 : i64} {
  func.func @_conv_bn_relu6_kernel(%arg0: i32, %arg1: i32, %arg2: memref<1x4x9x9x4xbf16, #tpu.memory_space<vmem>>, %arg3: memref<36x128xbf16, #tpu.memory_space<vmem>>, %arg4: memref<1x128xf32, #tpu.memory_space<vmem>>, %arg5: memref<1x64x8xbf16, #tpu.memory_space<vmem>>, %arg6: memref<64x36xbf16, #tpu.memory_space<vmem>>) attributes {dimension_semantics = [#tpu.dimension_semantics<parallel>, #tpu.dimension_semantics<parallel>], iteration_bounds = array<i64: 2, 1>, scalar_prefetch = 0 : i64, scratch_operands = 1 : i64, tpu.core_type = #tpu.core_type<tc>, window_params = [{transform_indices = @transform_0, window_bounds = array<i64: 1, 4, 9, 9, 4>}, {pipeline_mode = #tpu.pipeline_mode<synchronous>, transform_indices = @transform_1, window_bounds = array<i64: 36, 128>}, {pipeline_mode = #tpu.pipeline_mode<synchronous>, transform_indices = @transform_2, window_bounds = array<i64: 1, 128>}, {transform_indices = @transform_3, window_bounds = array<i64: 1, 64, 8>}]} {
    %c8_i32 = arith.constant 8 : i32
    %0 = arith.muli %arg1, %c8_i32 : i32
    %1 = tpu.assume_multiple %0, 8 : i32
    %c0_i32 = arith.constant 0 : i32
    %2 = arith.addi %1, %c0_i32 : i32
    %c0 = arith.constant 0 : index
    %c0_0 = arith.constant 0 : index
    %3 = arith.index_cast %2 : i32 to index
    %c0_1 = arith.constant 0 : index
    %c0_2 = arith.constant 0 : index
    %4 = vector.load %arg2[%c0, %c0_0, %3, %c0_1, %c0_2] : memref<1x4x9x9x4xbf16, #tpu.memory_space<vmem>>, vector<1x1x8x8x4xbf16>
    %5 = vector.shape_cast %4 : vector<1x1x8x8x4xbf16> to vector<8x8x4xbf16>
    %6 = vector.shape_cast %5 : vector<8x8x4xbf16> to vector<64x4xbf16>
    %c0_3 = arith.constant 0 : index
    %c0_4 = arith.constant 0 : index
    %7 = vector.load %arg6[%c0_3, %c0_4] : memref<64x36xbf16, #tpu.memory_space<vmem>>, vector<64x4xbf16>
    tpu.vector_store %arg6[%c0_3, %c0_4], %6 {strides = array<i32>} : memref<64x36xbf16, #tpu.memory_space<vmem>>, vector<64x4xbf16>,
    %c0_i32_5 = arith.constant 0 : i32
    %8 = arith.addi %1, %c0_i32_5 : i32
    %c0_6 = arith.constant 0 : index
    %c1 = arith.constant 1 : index
    %9 = arith.index_cast %8 : i32 to index
    %c0_7 = arith.constant 0 : index
    %c0_8 = arith.constant 0 : index
    %10 = vector.load %arg2[%c0_6, %c1, %9, %c0_7, %c0_8] : memref<1x4x9x9x4xbf16, #tpu.memory_space<vmem>>, vector<1x1x8x8x4xbf16>
    %11 = vector.shape_cast %10 : vector<1x1x8x8x4xbf16> to vector<8x8x4xbf16>
    %12 = vector.shape_cast %11 : vector<8x8x4xbf16> to vector<64x4xbf16>
    %c0_9 = arith.constant 0 : index
    %c4 = arith.constant 4 : index
    %13 = vector.load %arg6[%c0_9, %c4] : memref<64x36xbf16, #tpu.memory_space<vmem>>, vector<64x4xbf16>
    tpu.vector_store %arg6[%c0_9, %c4], %12 {strides = array<i32>} : memref<64x36xbf16, #tpu.memory_space<vmem>>, vector<64x4xbf16>,
    %c0_i32_10 = arith.constant 0 : i32
    %14 = arith.addi %1, %c0_i32_10 : i32
    %c0_11 = arith.constant 0 : index
    %c0_12 = arith.constant 0 : index
    %15 = arith.index_cast %14 : i32 to index
    %c1_13 = arith.constant 1 : index
    %c0_14 = arith.constant 0 : index
    %16 = vector.load %arg2[%c0_11, %c0_12, %15, %c1_13, %c0_14] : memref<1x4x9x9x4xbf16, #tpu.memory_space<vmem>>, vector<1x1x8x8x4xbf16>
    %17 = vector.shape_cast %16 : vector<1x1x8x8x4xbf16> to vector<8x8x4xbf16>
    %18 = vector.shape_cast %17 : vector<8x8x4xbf16> to vector<64x4xbf16>
    %c0_15 = arith.constant 0 : index
    %c8 = arith.constant 8 : index
    %19 = vector.load %arg6[%c0_15, %c8] : memref<64x36xbf16, #tpu.memory_space<vmem>>, vector<64x4xbf16>
    tpu.vector_store %arg6[%c0_15, %c8], %18 {strides = array<i32>} : memref<64x36xbf16, #tpu.memory_space<vmem>>, vector<64x4xbf16>,
    %c0_i32_16 = arith.constant 0 : i32
    %20 = arith.addi %1, %c0_i32_16 : i32
    %c0_17 = arith.constant 0 : index
    %c2 = arith.constant 2 : index
    %21 = arith.index_cast %20 : i32 to index
    %c0_18 = arith.constant 0 : index
    %c0_19 = arith.constant 0 : index
    %22 = vector.load %arg2[%c0_17, %c2, %21, %c0_18, %c0_19] : memref<1x4x9x9x4xbf16, #tpu.memory_space<vmem>>, vector<1x1x8x8x4xbf16>
    %23 = vector.shape_cast %22 : vector<1x1x8x8x4xbf16> to vector<8x8x4xbf16>
    %24 = vector.shape_cast %23 : vector<8x8x4xbf16> to vector<64x4xbf16>
    %c0_20 = arith.constant 0 : index
    %c12 = arith.constant 12 : index
    %25 = vector.load %arg6[%c0_20, %c12] : memref<64x36xbf16, #tpu.memory_space<vmem>>, vector<64x4xbf16>
    tpu.vector_store %arg6[%c0_20, %c12], %24 {strides = array<i32>} : memref<64x36xbf16, #tpu.memory_space<vmem>>, vector<64x4xbf16>,
    %c0_i32_21 = arith.constant 0 : i32
    %26 = arith.addi %1, %c0_i32_21 : i32
    %c0_22 = arith.constant 0 : index
    %c3 = arith.constant 3 : index
    %27 = arith.index_cast %26 : i32 to index
    %c0_23 = arith.constant 0 : index
    %c0_24 = arith.constant 0 : index
    %28 = vector.load %arg2[%c0_22, %c3, %27, %c0_23, %c0_24] : memref<1x4x9x9x4xbf16, #tpu.memory_space<vmem>>, vector<1x1x8x8x4xbf16>
    %29 = vector.shape_cast %28 : vector<1x1x8x8x4xbf16> to vector<8x8x4xbf16>
    %30 = vector.shape_cast %29 : vector<8x8x4xbf16> to vector<64x4xbf16>
    %c0_25 = arith.constant 0 : index
    %c16 = arith.constant 16 : index
    %31 = vector.load %arg6[%c0_25, %c16] : memref<64x36xbf16, #tpu.memory_space<vmem>>, vector<64x4xbf16>
    tpu.vector_store %arg6[%c0_25, %c16], %30 {strides = array<i32>} : memref<64x36xbf16, #tpu.memory_space<vmem>>, vector<64x4xbf16>,
    %c0_i32_26 = arith.constant 0 : i32
    %32 = arith.addi %1, %c0_i32_26 : i32
    %c0_27 = arith.constant 0 : index
    %c2_28 = arith.constant 2 : index
    %33 = arith.index_cast %32 : i32 to index
    %c1_29 = arith.constant 1 : index
    %c0_30 = arith.constant 0 : index
    %34 = vector.load %arg2[%c0_27, %c2_28, %33, %c1_29, %c0_30] : memref<1x4x9x9x4xbf16, #tpu.memory_space<vmem>>, vector<1x1x8x8x4xbf16>
    %35 = vector.shape_cast %34 : vector<1x1x8x8x4xbf16> to vector<8x8x4xbf16>
    %36 = vector.shape_cast %35 : vector<8x8x4xbf16> to vector<64x4xbf16>
    %c0_31 = arith.constant 0 : index
    %c20 = arith.constant 20 : index
    %37 = vector.load %arg6[%c0_31, %c20] : memref<64x36xbf16, #tpu.memory_space<vmem>>, vector<64x4xbf16>
    tpu.vector_store %arg6[%c0_31, %c20], %36 {strides = array<i32>} : memref<64x36xbf16, #tpu.memory_space<vmem>>, vector<64x4xbf16>,
    %c1_i32 = arith.constant 1 : i32
    %38 = arith.addi %1, %c1_i32 : i32
    %c0_32 = arith.constant 0 : index
    %c0_33 = arith.constant 0 : index
    %39 = arith.index_cast %38 : i32 to index
    %c0_34 = arith.constant 0 : index
    %c0_35 = arith.constant 0 : index
    %40 = vector.load %arg2[%c0_32, %c0_33, %39, %c0_34, %c0_35] : memref<1x4x9x9x4xbf16, #tpu.memory_space<vmem>>, vector<1x1x8x8x4xbf16>
    %41 = vector.shape_cast %40 : vector<1x1x8x8x4xbf16> to vector<8x8x4xbf16>
    %42 = vector.shape_cast %41 : vector<8x8x4xbf16> to vector<64x4xbf16>
    %c0_36 = arith.constant 0 : index
    %c24 = arith.constant 24 : index
    %43 = vector.load %arg6[%c0_36, %c24] : memref<64x36xbf16, #tpu.memory_space<vmem>>, vector<64x4xbf16>
    tpu.vector_store %arg6[%c0_36, %c24], %42 {strides = array<i32>} : memref<64x36xbf16, #tpu.memory_space<vmem>>, vector<64x4xbf16>,
    %c1_i32_37 = arith.constant 1 : i32
    %44 = arith.addi %1, %c1_i32_37 : i32
    %c0_38 = arith.constant 0 : index
    %c1_39 = arith.constant 1 : index
    %45 = arith.index_cast %44 : i32 to index
    %c0_40 = arith.constant 0 : index
    %c0_41 = arith.constant 0 : index
    %46 = vector.load %arg2[%c0_38, %c1_39, %45, %c0_40, %c0_41] : memref<1x4x9x9x4xbf16, #tpu.memory_space<vmem>>, vector<1x1x8x8x4xbf16>
    %47 = vector.shape_cast %46 : vector<1x1x8x8x4xbf16> to vector<8x8x4xbf16>
    %48 = vector.shape_cast %47 : vector<8x8x4xbf16> to vector<64x4xbf16>
    %c0_42 = arith.constant 0 : index
    %c28 = arith.constant 28 : index
    %49 = vector.load %arg6[%c0_42, %c28] : memref<64x36xbf16, #tpu.memory_space<vmem>>, vector<64x4xbf16>
    tpu.vector_store %arg6[%c0_42, %c28], %48 {strides = array<i32>} : memref<64x36xbf16, #tpu.memory_space<vmem>>, vector<64x4xbf16>,
    %c1_i32_43 = arith.constant 1 : i32
    %50 = arith.addi %1, %c1_i32_43 : i32
    %c0_44 = arith.constant 0 : index
    %c0_45 = arith.constant 0 : index
    %51 = arith.index_cast %50 : i32 to index
    %c1_46 = arith.constant 1 : index
    %c0_47 = arith.constant 0 : index
    %52 = vector.load %arg2[%c0_44, %c0_45, %51, %c1_46, %c0_47] : memref<1x4x9x9x4xbf16, #tpu.memory_space<vmem>>, vector<1x1x8x8x4xbf16>
    %53 = vector.shape_cast %52 : vector<1x1x8x8x4xbf16> to vector<8x8x4xbf16>
    %54 = vector.shape_cast %53 : vector<8x8x4xbf16> to vector<64x4xbf16>
    %c0_48 = arith.constant 0 : index
    %c32 = arith.constant 32 : index
    %55 = vector.load %arg6[%c0_48, %c32] : memref<64x36xbf16, #tpu.memory_space<vmem>>, vector<64x4xbf16>
    tpu.vector_store %arg6[%c0_48, %c32], %54 {strides = array<i32>} : memref<64x36xbf16, #tpu.memory_space<vmem>>, vector<64x4xbf16>,
    %c0_49 = arith.constant 0 : index
    %c0_50 = arith.constant 0 : index
    %56 = vector.load %arg6[%c0_49, %c0_50] : memref<64x36xbf16, #tpu.memory_space<vmem>>, vector<64x36xbf16>
    %c0_51 = arith.constant 0 : index
    %c0_52 = arith.constant 0 : index
    %57 = vector.load %arg3[%c0_51, %c0_52] : memref<36x128xbf16, #tpu.memory_space<vmem>>, vector<36x128xbf16>
    %cst = arith.constant dense<0.000000e+00> : vector<64x128xf32>
    %58 = tpu.matmul %56, %57, %cst {dimension_numbers = #tpu.dot_dimension_numbers<[1], [0], [0], [1], [0, 0, 1, 1], [], []>} : vector<64x36xbf16>, vector<36x128xbf16>, vector<64x128xf32> -> vector<64x128xf32>
    %c0_53 = arith.constant 0 : index
    %c0_54 = arith.constant 0 : index
    %59 = vector.load %arg4[%c0_53, %c0_54] : memref<1x128xf32, #tpu.memory_space<vmem>>, vector<1x128xf32>
    %60 = vector.broadcast %59 : vector<1x128xf32> to vector<64x128xf32>
    %61 = arith.addf %58, %60 : vector<64x128xf32>
    %cst_55 = arith.constant 0.000000e+00 : f32
    %cst_56 = arith.constant 6.000000e+00 : f32
    %62 = vector.broadcast %cst_55 : f32 to vector<64x128xf32>
    %63 = arith.maximumf %62, %61 : vector<64x128xf32>
    %64 = vector.broadcast %cst_56 : f32 to vector<64x128xf32>
    %65 = arith.minimumf %64, %63 : vector<64x128xf32>
    %66 = vector.extract_strided_slice %65 {offsets = [0, 0], sizes = [64, 8], strides = [1, 1]} : vector<64x128xf32> to vector<64x8xf32>
    %67 = arith.truncf %66 : vector<64x8xf32> to vector<64x8xbf16>
    %c0_57 = arith.constant 0 : index
    %c0_58 = arith.constant 0 : index
    %c0_59 = arith.constant 0 : index
    %68 = vector.load %arg5[%c0_57, %c0_58, %c0_59] : memref<1x64x8xbf16, #tpu.memory_space<vmem>>, vector<1x64x8xbf16>
    %69 = vector.shape_cast %68 : vector<1x64x8xbf16> to vector<64x8xbf16>
    %70 = vector.shape_cast %67 : vector<64x8xbf16> to vector<1x64x8xbf16>
    tpu.vector_store %arg5[%c0_57, %c0_58, %c0_59], %70 {strides = array<i32>} : memref<1x64x8xbf16, #tpu.memory_space<vmem>>, vector<1x64x8xbf16>,
    return
  }
  func.func @transform_0(%arg0: i32, %arg1: i32) -> (i32, i32, i32, i32, i32) {
    %c0_i32 = arith.constant 0 : i32
    %c0_i32_0 = arith.constant 0 : i32
    %c0_i32_1 = arith.constant 0 : i32
    %c0_i32_2 = arith.constant 0 : i32
    %c0_i32_3 = arith.constant 0 : i32
    return %arg0, %c0_i32, %c0_i32_0, %c0_i32_1, %c0_i32_2 : i32, i32, i32, i32, i32
  }
  func.func @transform_1(%arg0: i32, %arg1: i32) -> (i32, i32) {
    %c0_i32 = arith.constant 0 : i32
    %c0_i32_0 = arith.constant 0 : i32
    %c0_i32_1 = arith.constant 0 : i32
    return %c0_i32, %c0_i32_0 : i32, i32
  }
  func.func @transform_2(%arg0: i32, %arg1: i32) -> (i32, i32) {
    %c0_i32 = arith.constant 0 : i32
    %c0_i32_0 = arith.constant 0 : i32
    %c0_i32_1 = arith.constant 0 : i32
    return %c0_i32, %c0_i32_0 : i32, i32
  }
  func.func @transform_3(%arg0: i32, %arg1: i32) -> (i32, i32, i32) {
    %c0_i32 = arith.constant 0 : i32
    %c0_i32_0 = arith.constant 0 : i32
    return %arg0, %arg1, %c0_i32 : i32, i32, i32
  }
}

</mosaic_0001>

<llo_original>
// kernel: conv_bn_relu6.1
$region0: #{conv_bn_relu6.1}
  #allocation0 [shape = 'u32[]', space=smem, size = 0x4, offset = 0x4, fixed_abs, tag = 'smem constant byte address 0x4 - core index']
  #allocation1 [shape = 'u32[72,128]{1,0:T(1,128)}', space=vmem, size = 0x9000, scoped, tag = 'internal scratch']
  #allocation2 [shape = 'bf16[64,36]{1,0:T(8,128)(2,1)}', space=vmem, size = 0x4000, scoped, tag = 'scratch operand']
  %s0 = inlined_call_operand.vmem [shape: bf16[2,4,9,9,4], index: 0, kind: input, shape index: {}]
  %s1 = inlined_call_operand.vmem [shape: bf16[36,128], index: 1, kind: input, shape index: {}]
  %s2 = inlined_call_operand.vmem [shape: f32[1,128], index: 2, kind: input, shape index: {}]
  %s3 = inlined_call_operand.vmem [shape: bf16[2,64,8], index: 3, kind: output, shape index: {}]
  %s4 = sld [smem:[#allocation0]]
  $region45: #{conv_bn_relu6.1} parent=0
    _
  %s6 = ssub.s32 1, %s4
  %s7 = scalar_select 0, %s6, %s4
  loop: start=0, step=1, limit=4
  $region2: #{conv_bn_relu6.1} parent=0 // loop_pre_header
    _
  $region3: #{conv_bn_relu6.1} parent=0 // loop_header
    %s9 = sphi 0, %s13
    %p10 = scmp.ge.s32.totalorder %s9, 4
    %s16 = sphi 0, %s28
    %s17 = sphi 0, %s24
    %s18 = sphi 0, %s16
    %s19 = sphi 0, %s17
    %s20 = sphi 0, %s18
    %s21 = sphi 0, %s19
    %s31 = sphi 0, %s33
    %s34 = sphi 0, %s31
    %s35 = sphi 0, %s34
    %s51 = sphi 0, %s35
    %s55 = sphi 0, %s55
    %s57 = sphi 0, %s55
    %s58 = sphi 0, %s57
    %s72 = sphi 0, %s58
    %s76 = sphi 0, %s76
    %s78 = sphi 0, %s76
    %s79 = sphi 0, %s78
    %s93 = sphi 0, %s79
    %s101 = sphi 0, %s103
    %s104 = sphi 0, %s101
    %s105 = sphi 0, %s104
    %s121 = sphi 0, %s105
  $region4: #{conv_bn_relu6.1} parent=0 // loop_header_branch
    %12 = sbr.rel (%p10) target = $region8
  $region5: #{conv_bn_relu6.1} parent=0 // loop_body
    %s14 = ssub.s32 %s9, 1
    %s15 = ssub.s32 %s9, 2
    %s22 = sadd.s32 1, %s17
    %p23 = scmp.ge.s32.totalorder %s22, 1
    %s24 = scalar_select %p23, 0, %s22
    %s25 = sadd.s32 1, %s16
    %s26 = scalar_select %p23, %s25, %s16
    %p27 = scmp.ge.s32.totalorder %s26, 2
    %s28 = scalar_select %p27, 0, %s26
    %s29 = ssub.s32 %s16, %s28
    %p30 = scmp.eq.s32.totalorder %s29, 0
    %s32 = sadd.s32 %s31, 1
    %s33 = scalar_select %p30, %s31, %s32
    %p36 = pneg %p30
    %p37 = scmp.eq.s32.totalorder %s9, 1
    %p38 = por %p36, %p37
    %p39 = scmp.ne.s32.totalorder %s31, %s34
    %p40 = scmp.eq.s32.totalorder %s9, 0
    %p41 = por %p39, %p40
    %p42 = scmp.ne.s32.totalorder %s31, %s34
    %p43 = scmp.eq.s32.totalorder %s14, 1
    %p44 = por %p42, %p43
    %p45 = scmp.ne.s32.totalorder %s34, %s35
    %p46 = scmp.eq.s32.totalorder %s14, 0
    %p47 = por %p45, %p46
    %p48 = scmp.ne.s32.totalorder %s34, %s35
    %p49 = scmp.eq.s32.totalorder %s15, 1
    %p50 = por %p48, %p49
    %p52 = scmp.ne.s32.totalorder %s35, %s51
    %p53 = scmp.eq.s32.totalorder %s15, 0
    %p54 = por %p52, %p53
    %s56 = sadd.s32 %s55, 1
    %p59 = scmp.eq.s32.totalorder %s9, 1
    %p60 = scmp.ne.s32.totalorder %s55, %s57
    %p61 = scmp.eq.s32.totalorder %s9, 0
    %p62 = por %p60, %p61
    %p63 = scmp.ne.s32.totalorder %s55, %s57
    %p64 = scmp.eq.s32.totalorder %s14, 1
    %p65 = por %p63, %p64
    %p66 = scmp.ne.s32.totalorder %s57, %s58
    %p67 = scmp.eq.s32.totalorder %s14, 0
    %p68 = por %p66, %p67
    %p69 = scmp.ne.s32.totalorder %s57, %s58
    %p70 = scmp.eq.s32.totalorder %s15, 1
    %p71 = por %p69, %p70
    %p73 = scmp.ne.s32.totalorder %s58, %s72
    %p74 = scmp.eq.s32.totalorder %s15, 0
    %p75 = por %p73, %p74
    %s77 = sadd.s32 %s76, 1
    %p80 = scmp.eq.s32.totalorder %s9, 1
    %p81 = scmp.ne.s32.totalorder %s76, %s78
    %p82 = scmp.eq.s32.totalorder %s9, 0
    %p83 = por %p81, %p82
    %p84 = scmp.ne.s32.totalorder %s76, %s78
    %p85 = scmp.eq.s32.totalorder %s14, 1
    %p86 = por %p84, %p85
    %p87 = scmp.ne.s32.totalorder %s78, %s79
    %p88 = scmp.eq.s32.totalorder %s14, 0
    %p89 = por %p87, %p88
    %p90 = scmp.ne.s32.totalorder %s78, %s79
    %p91 = scmp.eq.s32.totalorder %s15, 1
    %p92 = por %p90, %p91
    %p94 = scmp.ne.s32.totalorder %s79, %s93
    %p95 = scmp.eq.s32.totalorder %s15, 0
    %p96 = por %p94, %p95
    %s97 = ssub.s32 %s16, %s28
    %s98 = ssub.s32 %s17, %s24
    %s99 = sor.u32 %s97, %s98
    %p100 = scmp.eq.s32.totalorder %s99, 0
    %s102 = sadd.s32 %s101, 1
    %s103 = scalar_select %p100, %s101, %s102
    %p106 = pneg %p100
    %p107 = scmp.eq.s32.totalorder %s9, 1
    %p108 = por %p106, %p107
    %p109 = scmp.ne.s32.totalorder %s101, %s104
    %p110 = scmp.eq.s32.totalorder %s9, 0
    %p111 = por %p109, %p110
    %p112 = scmp.ne.s32.totalorder %s101, %s104
    %p113 = scmp.eq.s32.totalorder %s14, 1
    %p114 = por %p112, %p113
    %p115 = scmp.ne.s32.totalorder %s104, %s105
    %p116 = scmp.eq.s32.totalorder %s14, 0
    %p117 = por %p115, %p116
    %p118 = scmp.ne.s32.totalorder %s104, %s105
    %p119 = scmp.eq.s32.totalorder %s15, 1
    %p120 = por %p118, %p119
    %p122 = scmp.ne.s32.totalorder %s105, %s121
    %p123 = scmp.eq.s32.totalorder %s15, 0
    %p124 = por %p122, %p123
    %p125 = scmp.le.s32.totalorder 1, %s9
    %p126 = scmp.lt.s32.totalorder %s9, 3
    %p127 = pnand %p125, %p126
    %p128 = pneg %p127
    // Predicated region
    $region9: #{conv_bn_relu6.1} parent=5 // pred_check
      _
    $region10: #{conv_bn_relu6.1} parent=5 // pred_check_branch
      %130 = sbr.rel (%p127) target = $region12
    $region11: #{conv_bn_relu6.1} parent=5 // pred_region
      %s131 = ssub.s32 %s9, 1
      // Predicated region
      $region13: #{conv_bn_relu6.1} parent=11 // pred_check
        %p132 = pneg %p68
      $region14: #{conv_bn_relu6.1} parent=11 // pred_check_branch
        %134 = sbr.rel (%p132) target = $region16
      $region15: #{conv_bn_relu6.1} parent=11 // pred_region
        _
      $region16: #{conv_bn_relu6.1} parent=11 // pred_fallthru
        _
      // Predicated region
      $region17: #{conv_bn_relu6.1} parent=11 // pred_check
        %p135 = pneg %p89
      $region18: #{conv_bn_relu6.1} parent=11 // pred_check_branch
        %137 = sbr.rel (%p135) target = $region20
      $region19: #{conv_bn_relu6.1} parent=11 // pred_region
        _
      $region20: #{conv_bn_relu6.1} parent=11 // pred_fallthru
        _
    $region12: #{conv_bn_relu6.1} parent=5 // pred_fallthru
      _
    %p138 = scmp.lt.s32.totalorder %s9, 2
    // Predicated region
    $region21: #{conv_bn_relu6.1} parent=5 // pred_check
      %p139 = pneg %p138
    $region22: #{conv_bn_relu6.1} parent=5 // pred_check_branch
      %141 = sbr.rel (%p139) target = $region24
    $region23: #{conv_bn_relu6.1} parent=5 // pred_region
      // Predicated region
      $region25: #{conv_bn_relu6.1} parent=23 // pred_check
        %p142 = pneg %p41
      $region26: #{conv_bn_relu6.1} parent=23 // pred_check_branch
        %144 = sbr.rel (%p142) target = $region28
      $region27: #{conv_bn_relu6.1} parent=23 // pred_region
        %p145 = scmp.lt.s32.totalorder %s16, 1
        %s146 = scalar_select %p145, %s16, 1
        %s147 = smul.addr %s146, 72
        %s148 = smul.addr %s147, 4
        %s149 = scalar_lea.vmem %s0, %s148
      $region28: #{conv_bn_relu6.1} parent=23 // pred_fallthru
        _
    $region24: #{conv_bn_relu6.1} parent=5 // pred_fallthru
      _
    %p150 = scmp.le.s32.totalorder 1, %s9
    %p151 = scmp.lt.s32.totalorder %s9, 3
    %p152 = pnand %p150, %p151
    %p153 = pneg %p152
    // Predicated region
    $region29: #{conv_bn_relu6.1} parent=5 // pred_check
      _
    $region30: #{conv_bn_relu6.1} parent=5 // pred_check_branch
      %155 = sbr.rel (%p152) target = $region32
    $region31: #{conv_bn_relu6.1} parent=5 // pred_region
      %s156 = ssub.s32 %s9, 1
      %p157 = scmp.lt.s32.totalorder %s18, 1
      %s158 = scalar_select %p157, %s18, 1
      %s159 = smul.addr %s158, 72
      %s160 = smul.addr %s159, 4
      %s161 = scalar_lea.vmem %s0, %s160
      %p162 = pneg %p47
      %p163 = pneg %p44
      %p164 = pneg %p68
      %p165 = pneg %p65
      %p166 = pneg %p89
      %p167 = pneg %p86
      %p168 = pneg %p117
      %p169 = pneg %p114
      %s170 = smul.u32 8, %s19
      %p171 = scmp.lt.s32.totalorder %s18, 1
      %s172 = scalar_select %p171, %s18, 1
      %p173 = scmp.lt.s32.totalorder %s170, 7
      %s174 = scalar_select %p173, %s170, 7
      %s175 = smul.addr %s172, 8
      %s176 = sadd.s32 %s174, %s175
      %s177 = smul.addr %s176, 4
      %s178 = scalar_lea.vmem %s3, %s177
      %p179 = scmp.lt.s32.totalorder %s18, 1
      %s180 = scalar_select %p179, %s18, 1
      %s181 = smul.addr %s180, 72
      %s182 = smul.addr %s181, 4
      %s183 = scalar_lea.vmem %s0, %s182
      %s184 = smul.u32 8, %s19
      %p185 = scmp.lt.s32.totalorder %s18, 1
      %s186 = scalar_select %p185, %s18, 1
      %p187 = scmp.lt.s32.totalorder %s184, 7
      %s188 = scalar_select %p187, %s184, 7
      %s189 = smul.addr %s186, 8
      %s190 = sadd.s32 %s188, %s189
      %s191 = smul.addr %s190, 4
      %s192 = scalar_lea.vmem %s3, %s191
      %s193 = smul.u32 8, %s19
      %s195 = smul.u32 %s19, 8
      %s196 = smul.u32 %s195, 2
      %s197 = smul.addr %s196, 4
      %s198 = scalar_lea.vmem %s183, %s197
      %v199 = vld [vmem:[%s198] sm:$0xf]
      %v200 = vld [vmem:[%s198 + $0x8] sm:$0xf]
      %v201 = vld [vmem:[%s198 + $0x10] sm:$0xf]
      %v202 = vld [vmem:[%s198 + $0x18] sm:$0xf]
      %v203 = vld [vmem:[%s198 + $0x20] sm:$0xf]
      %v204 = vld [vmem:[%s198 + $0x28] sm:$0xf]
      %v205 = vld [vmem:[%s198 + $0x30] sm:$0xf]
      %v206 = vld [vmem:[%s198 + $0x38] sm:$0xf]
      %vm207 = vcmask 27648
      %208 = vst.msk [vmem:[#allocation2] sm:$0xf] %vm207, %v199
      %209 = vst.msk [vmem:[#allocation2 + $0x4] sm:$0xf] %vm207, %v200
      %210 = vst.msk [vmem:[#allocation2 + $0x8] sm:$0xf] %vm207, %v201
      %211 = vst.msk [vmem:[#allocation2 + $0xc] sm:$0xf] %vm207, %v202
      %212 = vst.msk [vmem:[#allocation2 + $0x10] sm:$0xf] %vm207, %v203
      %213 = vst.msk [vmem:[#allocation2 + $0x14] sm:$0xf] %vm207, %v204
      %214 = vst.msk [vmem:[#allocation2 + $0x18] sm:$0xf] %vm207, %v205
      %215 = vst.msk [vmem:[#allocation2 + $0x1c] sm:$0xf] %vm207, %v206
      %s216 = sadd.s32 %s196, 18
      %s217 = smul.addr %s216, 4
      %s218 = scalar_lea.vmem %s183, %s217
      %v219 = vld [vmem:[%s218] sm:$0xf]
      %v220 = vld [vmem:[%s218 + $0x8] sm:$0xf]
      %v221 = vld [vmem:[%s218 + $0x10] sm:$0xf]
      %v222 = vld [vmem:[%s218 + $0x18] sm:$0xf]
      %v223 = vld [vmem:[%s218 + $0x20] sm:$0xf]
      %v224 = vld [vmem:[%s218 + $0x28] sm:$0xf]
      %v225 = vld [vmem:[%s218 + $0x30] sm:$0xf]
      %v226 = vld [vmem:[%s218 + $0x38] sm:$0xf]
      %235 = vrot.lane.b32.xlu0 %v219, 4
      %v236 = vpop.permute.xlu0 %235
      %237 = vrot.lane.b32.xlu0 %v220, 4
      %v238 = vpop.permute.xlu0 %237
      %239 = vrot.lane.b32.xlu0 %v221, 4
      %v240 = vpop.permute.xlu0 %239
      %241 = vrot.lane.b32.xlu0 %v222, 4
      %v242 = vpop.permute.xlu0 %241
      %243 = vrot.lane.b32.xlu0 %v223, 4
      %v244 = vpop.permute.xlu0 %243
      %245 = vrot.lane.b32.xlu0 %v224, 4
      %v246 = vpop.permute.xlu0 %245
      %247 = vrot.lane.b32.xlu0 %v225, 4
      %v248 = vpop.permute.xlu0 %247
      %249 = vrot.lane.b32.xlu0 %v226, 4
      %v250 = vpop.permute.xlu0 %249
      %vm259 = vcmask 60448
      %260 = vst.msk [vmem:[#allocation2] sm:$0xf] %vm259, %v236
      %261 = vst.msk [vmem:[#allocation2 + $0x4] sm:$0xf] %vm259, %v238
      %262 = vst.msk [vmem:[#allocation2 + $0x8] sm:$0xf] %vm259, %v240
      %263 = vst.msk [vmem:[#allocation2 + $0xc] sm:$0xf] %vm259, %v242
      %264 = vst.msk [vmem:[#allocation2 + $0x10] sm:$0xf] %vm259, %v244
      %265 = vst.msk [vmem:[#allocation2 + $0x14] sm:$0xf] %vm259, %v246
      %266 = vst.msk [vmem:[#allocation2 + $0x18] sm:$0xf] %vm259, %v248
      %267 = vst.msk [vmem:[#allocation2 + $0x1c] sm:$0xf] %vm259, %v250
      %v268 = vld [vmem:[%s198] sm:$0xf]
      %v269 = vld [vmem:[%s198 + $0x4] sm:$0x1]
      %v270 = vld [vmem:[%s198 + $0x8] sm:$0xf]
      %v271 = vld [vmem:[%s198 + $0xc] sm:$0x1]
      %v272 = vld [vmem:[%s198 + $0x10] sm:$0xf]
      %v273 = vld [vmem:[%s198 + $0x14] sm:$0x1]
      %v274 = vld [vmem:[%s198 + $0x18] sm:$0xf]
      %v275 = vld [vmem:[%s198 + $0x1c] sm:$0x1]
      %v276 = vld [vmem:[%s198 + $0x20] sm:$0xf]
      %v277 = vld [vmem:[%s198 + $0x24] sm:$0x1]
      %v278 = vld [vmem:[%s198 + $0x28] sm:$0xf]
      %v279 = vld [vmem:[%s198 + $0x2c] sm:$0x1]
      %v280 = vld [vmem:[%s198 + $0x30] sm:$0xf]
      %v281 = vld [vmem:[%s198 + $0x34] sm:$0x1]
      %v282 = vld [vmem:[%s198 + $0x38] sm:$0xf]
      %v283 = vld [vmem:[%s198 + $0x3c] sm:$0x1]
      %vm284 = vsmask.f32 3328
      %vm285 = vsmask.f32 7440
      %vm286 = vmor %vm284, %vm285
      %v288 = vshrl.u32 %v268, 16
      %v290 = vrot.slane %v288, 4
      %v291 = vshll.u32 %v268, 16
      %v293 = vrot.slane %v291, 5
      %v294 = vor.u32 %v290, %v293
      %v295 = vrot.slane %v294, 4
      %v297 = vshll.u32 %v269, 16
      %v299 = vrot.slane %v297, 5
      %v300 = vsel %vm286, %v295, %v299
      %v302 = vshrl.u32 %v270, 16
      %v304 = vrot.slane %v302, 4
      %v305 = vshll.u32 %v270, 16
      %v307 = vrot.slane %v305, 5
      %v308 = vor.u32 %v304, %v307
      %v309 = vrot.slane %v308, 4
      %v311 = vshll.u32 %v271, 16
      %v313 = vrot.slane %v311, 5
      %v314 = vsel %vm286, %v309, %v313
      %v316 = vshrl.u32 %v272, 16
      %v318 = vrot.slane %v316, 4
      %v319 = vshll.u32 %v272, 16
      %v321 = vrot.slane %v319, 5
      %v322 = vor.u32 %v318, %v321
      %v323 = vrot.slane %v322, 4
      %v325 = vshll.u32 %v273, 16
      %v327 = vrot.slane %v325, 5
      %v328 = vsel %vm286, %v323, %v327
      %v330 = vshrl.u32 %v274, 16
      %v332 = vrot.slane %v330, 4
      %v333 = vshll.u32 %v274, 16
      %v335 = vrot.slane %v333, 5
      %v336 = vor.u32 %v332, %v335
      %v337 = vrot.slane %v336, 4
      %v339 = vshll.u32 %v275, 16
      %v341 = vrot.slane %v339, 5
      %v342 = vsel %vm286, %v337, %v341
      %v344 = vshrl.u32 %v276, 16
      %v346 = vrot.slane %v344, 4
      %v347 = vshll.u32 %v276, 16
      %v349 = vrot.slane %v347, 5
      %v350 = vor.u32 %v346, %v349
      %v351 = vrot.slane %v350, 4
      %v353 = vshll.u32 %v277, 16
      %v355 = vrot.slane %v353, 5
      %v356 = vsel %vm286, %v351, %v355
      %v358 = vshrl.u32 %v278, 16
      %v360 = vrot.slane %v358, 4
      %v361 = vshll.u32 %v278, 16
      %v363 = vrot.slane %v361, 5
      %v364 = vor.u32 %v360, %v363
      %v365 = vrot.slane %v364, 4
      %v367 = vshll.u32 %v279, 16
      %v369 = vrot.slane %v367, 5
      %v370 = vsel %vm286, %v365, %v369
      %v372 = vshrl.u32 %v280, 16
      %v374 = vrot.slane %v372, 4
      %v375 = vshll.u32 %v280, 16
      %v377 = vrot.slane %v375, 5
      %v378 = vor.u32 %v374, %v377
      %v379 = vrot.slane %v378, 4
      %v381 = vshll.u32 %v281, 16
      %v383 = vrot.slane %v381, 5
      %v384 = vsel %vm286, %v379, %v383
      %v386 = vshrl.u32 %v282, 16
      %v388 = vrot.slane %v386, 4
      %v389 = vshll.u32 %v282, 16
      %v391 = vrot.slane %v389, 5
      %v392 = vor.u32 %v388, %v391
      %v393 = vrot.slane %v392, 4
      %v395 = vshll.u32 %v283, 16
      %v397 = vrot.slane %v395, 5
      %v398 = vsel %vm286, %v393, %v397
      %399 = vrot.lane.b32.xlu0 %v300, 8
      %v400 = vpop.permute.xlu0 %399
      %401 = vrot.lane.b32.xlu0 %v314, 8
      %v402 = vpop.permute.xlu0 %401
      %403 = vrot.lane.b32.xlu0 %v328, 8
      %v404 = vpop.permute.xlu0 %403
      %405 = vrot.lane.b32.xlu0 %v342, 8
      %v406 = vpop.permute.xlu0 %405
      %407 = vrot.lane.b32.xlu0 %v356, 8
      %v408 = vpop.permute.xlu0 %407
      %409 = vrot.lane.b32.xlu0 %v370, 8
      %v410 = vpop.permute.xlu0 %409
      %411 = vrot.lane.b32.xlu0 %v384, 8
      %v412 = vpop.permute.xlu0 %411
      %413 = vrot.lane.b32.xlu0 %v398, 8
      %v414 = vpop.permute.xlu0 %413
      %vm423 = vcmask 93248
      %424 = vst.msk [vmem:[#allocation2] sm:$0xf] %vm423, %v400
      %425 = vst.msk [vmem:[#allocation2 + $0x4] sm:$0xf] %vm423, %v402
      %426 = vst.msk [vmem:[#allocation2 + $0x8] sm:$0xf] %vm423, %v404
      %427 = vst.msk [vmem:[#allocation2 + $0xc] sm:$0xf] %vm423, %v406
      %428 = vst.msk [vmem:[#allocation2 + $0x10] sm:$0xf] %vm423, %v408
      %429 = vst.msk [vmem:[#allocation2 + $0x14] sm:$0xf] %vm423, %v410
      %430 = vst.msk [vmem:[#allocation2 + $0x18] sm:$0xf] %vm423, %v412
      %431 = vst.msk [vmem:[#allocation2 + $0x1c] sm:$0xf] %vm423, %v414
      %s432 = sadd.s32 %s196, 36
      %s433 = smul.addr %s432, 4
      %s434 = scalar_lea.vmem %s183, %s433
      %v435 = vld [vmem:[%s434] sm:$0xf]
      %v436 = vld [vmem:[%s434 + $0x8] sm:$0xf]
      %v437 = vld [vmem:[%s434 + $0x10] sm:$0xf]
      %v438 = vld [vmem:[%s434 + $0x18] sm:$0xf]
      %v439 = vld [vmem:[%s434 + $0x20] sm:$0xf]
      %v440 = vld [vmem:[%s434 + $0x28] sm:$0xf]
      %v441 = vld [vmem:[%s434 + $0x30] sm:$0xf]
      %v442 = vld [vmem:[%s434 + $0x38] sm:$0xf]
      %451 = vrot.lane.b32.xlu0 %v435, 12
      %v452 = vpop.permute.xlu0 %451
      %453 = vrot.lane.b32.xlu0 %v436, 12
      %v454 = vpop.permute.xlu0 %453
      %455 = vrot.lane.b32.xlu0 %v437, 12
      %v456 = vpop.permute.xlu0 %455
      %457 = vrot.lane.b32.xlu0 %v438, 12
      %v458 = vpop.permute.xlu0 %457
      %459 = vrot.lane.b32.xlu0 %v439, 12
      %v460 = vpop.permute.xlu0 %459
      %461 = vrot.lane.b32.xlu0 %v440, 12
      %v462 = vpop.permute.xlu0 %461
      %463 = vrot.lane.b32.xlu0 %v441, 12
      %v464 = vpop.permute.xlu0 %463
      %465 = vrot.lane.b32.xlu0 %v442, 12
      %v466 = vpop.permute.xlu0 %465
      %vm475 = vcmask 126048
      %476 = vst.msk [vmem:[#allocation2] sm:$0xf] %vm475, %v452
      %477 = vst.msk [vmem:[#allocation2 + $0x4] sm:$0xf] %vm475, %v454
      %478 = vst.msk [vmem:[#allocation2 + $0x8] sm:$0xf] %vm475, %v456
      %479 = vst.msk [vmem:[#allocation2 + $0xc] sm:$0xf] %vm475, %v458
      %480 = vst.msk [vmem:[#allocation2 + $0x10] sm:$0xf] %vm475, %v460
      %481 = vst.msk [vmem:[#allocation2 + $0x14] sm:$0xf] %vm475, %v462
      %482 = vst.msk [vmem:[#allocation2 + $0x18] sm:$0xf] %vm475, %v464
      %483 = vst.msk [vmem:[#allocation2 + $0x1c] sm:$0xf] %vm475, %v466
      %s484 = sadd.s32 %s196, 54
      %s485 = smul.addr %s484, 4
      %s486 = scalar_lea.vmem %s183, %s485
      %v487 = vld [vmem:[%s486] sm:$0xf]
      %v488 = vld [vmem:[%s486 + $0x8] sm:$0xf]
      %v489 = vld [vmem:[%s486 + $0x10] sm:$0xf]
      %v490 = vld [vmem:[%s486 + $0x18] sm:$0xf]
      %v491 = vld [vmem:[%s486 + $0x20] sm:$0xf]
      %v492 = vld [vmem:[%s486 + $0x28] sm:$0xf]
      %v493 = vld [vmem:[%s486 + $0x30] sm:$0xf]
      %v494 = vld [vmem:[%s486 + $0x38] sm:$0xf]
      %503 = vrot.lane.b32.xlu0 %v487, 16
      %v504 = vpop.permute.xlu0 %503
      %505 = vrot.lane.b32.xlu0 %v488, 16
      %v506 = vpop.permute.xlu0 %505
      %507 = vrot.lane.b32.xlu0 %v489, 16
      %v508 = vpop.permute.xlu0 %507
      %509 = vrot.lane.b32.xlu0 %v490, 16
      %v510 = vpop.permute.xlu0 %509
      %511 = vrot.lane.b32.xlu0 %v491, 16
      %v512 = vpop.permute.xlu0 %511
      %513 = vrot.lane.b32.xlu0 %v492, 16
      %v514 = vpop.permute.xlu0 %513
      %515 = vrot.lane.b32.xlu0 %v493, 16
      %v516 = vpop.permute.xlu0 %515
      %517 = vrot.lane.b32.xlu0 %v494, 16
      %v518 = vpop.permute.xlu0 %517
      %vm527 = vcmask 158848
      %528 = vst.msk [vmem:[#allocation2] sm:$0xf] %vm527, %v504
      %529 = vst.msk [vmem:[#allocation2 + $0x4] sm:$0xf] %vm527, %v506
      %530 = vst.msk [vmem:[#allocation2 + $0x8] sm:$0xf] %vm527, %v508
      %531 = vst.msk [vmem:[#allocation2 + $0xc] sm:$0xf] %vm527, %v510
      %532 = vst.msk [vmem:[#allocation2 + $0x10] sm:$0xf] %vm527, %v512
      %533 = vst.msk [vmem:[#allocation2 + $0x14] sm:$0xf] %vm527, %v514
      %534 = vst.msk [vmem:[#allocation2 + $0x18] sm:$0xf] %vm527, %v516
      %535 = vst.msk [vmem:[#allocation2 + $0x1c] sm:$0xf] %vm527, %v518
      %v536 = vld [vmem:[%s434] sm:$0xf]
      %v537 = vld [vmem:[%s434 + $0x4] sm:$0x1]
      %v538 = vld [vmem:[%s434 + $0x8] sm:$0xf]
      %v539 = vld [vmem:[%s434 + $0xc] sm:$0x1]
      %v540 = vld [vmem:[%s434 + $0x10] sm:$0xf]
      %v541 = vld [vmem:[%s434 + $0x14] sm:$0x1]
      %v542 = vld [vmem:[%s434 + $0x18] sm:$0xf]
      %v543 = vld [vmem:[%s434 + $0x1c] sm:$0x1]
      %v544 = vld [vmem:[%s434 + $0x20] sm:$0xf]
      %v545 = vld [vmem:[%s434 + $0x24] sm:$0x1]
      %v546 = vld [vmem:[%s434 + $0x28] sm:$0xf]
      %v547 = vld [vmem:[%s434 + $0x2c] sm:$0x1]
      %v548 = vld [vmem:[%s434 + $0x30] sm:$0xf]
      %v549 = vld [vmem:[%s434 + $0x34] sm:$0x1]
      %v550 = vld [vmem:[%s434 + $0x38] sm:$0xf]
      %v551 = vld [vmem:[%s434 + $0x3c] sm:$0x1]
      %v553 = vshrl.u32 %v536, 16
      %v555 = vrot.slane %v553, 4
      %v556 = vshll.u32 %v536, 16
      %v558 = vrot.slane %v556, 5
      %v559 = vor.u32 %v555, %v558
      %v560 = vrot.slane %v559, 4
      %v562 = vshll.u32 %v537, 16
      %v564 = vrot.slane %v562, 5
      %v565 = vsel %vm286, %v560, %v564
      %v567 = vshrl.u32 %v538, 16
      %v569 = vrot.slane %v567, 4
      %v570 = vshll.u32 %v538, 16
      %v572 = vrot.slane %v570, 5
      %v573 = vor.u32 %v569, %v572
      %v574 = vrot.slane %v573, 4
      %v576 = vshll.u32 %v539, 16
      %v578 = vrot.slane %v576, 5
      %v579 = vsel %vm286, %v574, %v578
      %v581 = vshrl.u32 %v540, 16
      %v583 = vrot.slane %v581, 4
      %v584 = vshll.u32 %v540, 16
      %v586 = vrot.slane %v584, 5
      %v587 = vor.u32 %v583, %v586
      %v588 = vrot.slane %v587, 4
      %v590 = vshll.u32 %v541, 16
      %v592 = vrot.slane %v590, 5
      %v593 = vsel %vm286, %v588, %v592
      %v595 = vshrl.u32 %v542, 16
      %v597 = vrot.slane %v595, 4
      %v598 = vshll.u32 %v542, 16
      %v600 = vrot.slane %v598, 5
      %v601 = vor.u32 %v597, %v600
      %v602 = vrot.slane %v601, 4
      %v604 = vshll.u32 %v543, 16
      %v606 = vrot.slane %v604, 5
      %v607 = vsel %vm286, %v602, %v606
      %v609 = vshrl.u32 %v544, 16
      %v611 = vrot.slane %v609, 4
      %v612 = vshll.u32 %v544, 16
      %v614 = vrot.slane %v612, 5
      %v615 = vor.u32 %v611, %v614
      %v616 = vrot.slane %v615, 4
      %v618 = vshll.u32 %v545, 16
      %v620 = vrot.slane %v618, 5
      %v621 = vsel %vm286, %v616, %v620
      %v623 = vshrl.u32 %v546, 16
      %v625 = vrot.slane %v623, 4
      %v626 = vshll.u32 %v546, 16
      %v628 = vrot.slane %v626, 5
      %v629 = vor.u32 %v625, %v628
      %v630 = vrot.slane %v629, 4
      %v632 = vshll.u32 %v547, 16
      %v634 = vrot.slane %v632, 5
      %v635 = vsel %vm286, %v630, %v634
      %v637 = vshrl.u32 %v548, 16
      %v639 = vrot.slane %v637, 4
      %v640 = vshll.u32 %v548, 16
      %v642 = vrot.slane %v640, 5
      %v643 = vor.u32 %v639, %v642
      %v644 = vrot.slane %v643, 4
      %v646 = vshll.u32 %v549, 16
      %v648 = vrot.slane %v646, 5
      %v649 = vsel %vm286, %v644, %v648
      %v651 = vshrl.u32 %v550, 16
      %v653 = vrot.slane %v651, 4
      %v654 = vshll.u32 %v550, 16
      %v656 = vrot.slane %v654, 5
      %v657 = vor.u32 %v653, %v656
      %v658 = vrot.slane %v657, 4
      %v660 = vshll.u32 %v551, 16
      %v662 = vrot.slane %v660, 5
      %v663 = vsel %vm286, %v658, %v662
      %664 = vrot.lane.b32.xlu0 %v565, 20
      %v665 = vpop.permute.xlu0 %664
      %666 = vrot.lane.b32.xlu0 %v579, 20
      %v667 = vpop.permute.xlu0 %666
      %668 = vrot.lane.b32.xlu0 %v593, 20
      %v669 = vpop.permute.xlu0 %668
      %670 = vrot.lane.b32.xlu0 %v607, 20
      %v671 = vpop.permute.xlu0 %670
      %672 = vrot.lane.b32.xlu0 %v621, 20
      %v673 = vpop.permute.xlu0 %672
      %674 = vrot.lane.b32.xlu0 %v635, 20
      %v675 = vpop.permute.xlu0 %674
      %676 = vrot.lane.b32.xlu0 %v649, 20
      %v677 = vpop.permute.xlu0 %676
      %678 = vrot.lane.b32.xlu0 %v663, 20
      %v679 = vpop.permute.xlu0 %678
      %vm688 = vcmask 191648
      %689 = vst.msk [vmem:[#allocation2] sm:$0xf] %vm688, %v665
      %690 = vst.msk [vmem:[#allocation2 + $0x4] sm:$0xf] %vm688, %v667
      %691 = vst.msk [vmem:[#allocation2 + $0x8] sm:$0xf] %vm688, %v669
      %692 = vst.msk [vmem:[#allocation2 + $0xc] sm:$0xf] %vm688, %v671
      %693 = vst.msk [vmem:[#allocation2 + $0x10] sm:$0xf] %vm688, %v673
      %694 = vst.msk [vmem:[#allocation2 + $0x14] sm:$0xf] %vm688, %v675
      %695 = vst.msk [vmem:[#allocation2 + $0x18] sm:$0xf] %vm688, %v677
      %696 = vst.msk [vmem:[#allocation2 + $0x1c] sm:$0xf] %vm688, %v679
      %s697 = sadd.s32 %s195, 1
      %s698 = smul.u32 %s697, 2
      %s699 = smul.addr %s698, 4
      %s700 = scalar_lea.vmem %s183, %s699
      %v701 = vld [vmem:[%s700] sm:$0xf]
      %v702 = vld [vmem:[%s700 + $0x8] sm:$0xf]
      %v703 = vld [vmem:[%s700 + $0x10] sm:$0xf]
      %v704 = vld [vmem:[%s700 + $0x18] sm:$0xf]
      %v705 = vld [vmem:[%s700 + $0x20] sm:$0xf]
      %v706 = vld [vmem:[%s700 + $0x28] sm:$0xf]
      %v707 = vld [vmem:[%s700 + $0x30] sm:$0xf]
      %v708 = vld [vmem:[%s700 + $0x38] sm:$0xf]
      %717 = vrot.lane.b32.xlu0 %v701, 24
      %v718 = vpop.permute.xlu0 %717
      %719 = vrot.lane.b32.xlu0 %v702, 24
      %v720 = vpop.permute.xlu0 %719
      %721 = vrot.lane.b32.xlu0 %v703, 24
      %v722 = vpop.permute.xlu0 %721
      %723 = vrot.lane.b32.xlu0 %v704, 24
      %v724 = vpop.permute.xlu0 %723
      %725 = vrot.lane.b32.xlu0 %v705, 24
      %v726 = vpop.permute.xlu0 %725
      %727 = vrot.lane.b32.xlu0 %v706, 24
      %v728 = vpop.permute.xlu0 %727
      %729 = vrot.lane.b32.xlu0 %v707, 24
      %v730 = vpop.permute.xlu0 %729
      %731 = vrot.lane.b32.xlu0 %v708, 24
      %v732 = vpop.permute.xlu0 %731
      %vm741 = vcmask 224448
      %742 = vst.msk [vmem:[#allocation2] sm:$0xf] %vm741, %v718
      %743 = vst.msk [vmem:[#allocation2 + $0x4] sm:$0xf] %vm741, %v720
      %744 = vst.msk [vmem:[#allocation2 + $0x8] sm:$0xf] %vm741, %v722
      %745 = vst.msk [vmem:[#allocation2 + $0xc] sm:$0xf] %vm741, %v724
      %746 = vst.msk [vmem:[#allocation2 + $0x10] sm:$0xf] %vm741, %v726
      %747 = vst.msk [vmem:[#allocation2 + $0x14] sm:$0xf] %vm741, %v728
      %748 = vst.msk [vmem:[#allocation2 + $0x18] sm:$0xf] %vm741, %v730
      %749 = vst.msk [vmem:[#allocation2 + $0x1c] sm:$0xf] %vm741, %v732
      %s750 = sadd.s32 %s698, 18
      %s751 = smul.addr %s750, 4
      %s752 = scalar_lea.vmem %s183, %s751
      %v753 = vld [vmem:[%s752] sm:$0xf]
      %v754 = vld [vmem:[%s752 + $0x8] sm:$0xf]
      %v755 = vld [vmem:[%s752 + $0x10] sm:$0xf]
      %v756 = vld [vmem:[%s752 + $0x18] sm:$0xf]
      %v757 = vld [vmem:[%s752 + $0x20] sm:$0xf]
      %v758 = vld [vmem:[%s752 + $0x28] sm:$0xf]
      %v759 = vld [vmem:[%s752 + $0x30] sm:$0xf]
      %v760 = vld [vmem:[%s752 + $0x38] sm:$0xf]
      %769 = vrot.lane.b32.xlu0 %v753, 28
      %v770 = vpop.permute.xlu0 %769
      %771 = vrot.lane.b32.xlu0 %v754, 28
      %v772 = vpop.permute.xlu0 %771
      %773 = vrot.lane.b32.xlu0 %v755, 28
      %v774 = vpop.permute.xlu0 %773
      %775 = vrot.lane.b32.xlu0 %v756, 28
      %v776 = vpop.permute.xlu0 %775
      %777 = vrot.lane.b32.xlu0 %v757, 28
      %v778 = vpop.permute.xlu0 %777
      %779 = vrot.lane.b32.xlu0 %v758, 28
      %v780 = vpop.permute.xlu0 %779
      %781 = vrot.lane.b32.xlu0 %v759, 28
      %v782 = vpop.permute.xlu0 %781
      %783 = vrot.lane.b32.xlu0 %v760, 28
      %v784 = vpop.permute.xlu0 %783
      %vm793 = vcmask 257248
      %794 = vst.msk [vmem:[#allocation2] sm:$0xf] %vm793, %v770
      %795 = vst.msk [vmem:[#allocation2 + $0x4] sm:$0xf] %vm793, %v772
      %796 = vst.msk [vmem:[#allocation2 + $0x8] sm:$0xf] %vm793, %v774
      %797 = vst.msk [vmem:[#allocation2 + $0xc] sm:$0xf] %vm793, %v776
      %798 = vst.msk [vmem:[#allocation2 + $0x10] sm:$0xf] %vm793, %v778
      %799 = vst.msk [vmem:[#allocation2 + $0x14] sm:$0xf] %vm793, %v780
      %800 = vst.msk [vmem:[#allocation2 + $0x18] sm:$0xf] %vm793, %v782
      %801 = vst.msk [vmem:[#allocation2 + $0x1c] sm:$0xf] %vm793, %v784
      %v802 = vld [vmem:[%s700] sm:$0xf]
      %v803 = vld [vmem:[%s700 + $0x4] sm:$0x1]
      %v804 = vld [vmem:[%s700 + $0x8] sm:$0xf]
      %v805 = vld [vmem:[%s700 + $0xc] sm:$0x1]
      %v806 = vld [vmem:[%s700 + $0x10] sm:$0xf]
      %v807 = vld [vmem:[%s700 + $0x14] sm:$0x1]
      %v808 = vld [vmem:[%s700 + $0x18] sm:$0xf]
      %v809 = vld [vmem:[%s700 + $0x1c] sm:$0x1]
      %v810 = vld [vmem:[%s700 + $0x20] sm:$0xf]
      %v811 = vld [vmem:[%s700 + $0x24] sm:$0x1]
      %v812 = vld [vmem:[%s700 + $0x28] sm:$0xf]
      %v813 = vld [vmem:[%s700 + $0x2c] sm:$0x1]
      %v814 = vld [vmem:[%s700 + $0x30] sm:$0xf]
      %v815 = vld [vmem:[%s700 + $0x34] sm:$0x1]
      %v816 = vld [vmem:[%s700 + $0x38] sm:$0xf]
      %v817 = vld [vmem:[%s700 + $0x3c] sm:$0x1]
      %v819 = vshrl.u32 %v802, 16
      %v821 = vrot.slane %v819, 4
      %v822 = vshll.u32 %v802, 16
      %v824 = vrot.slane %v822, 5
      %v825 = vor.u32 %v821, %v824
      %v826 = vrot.slane %v825, 4
      %v828 = vshll.u32 %v803, 16
      %v830 = vrot.slane %v828, 5
      %v831 = vsel %vm286, %v826, %v830
      %v833 = vshrl.u32 %v804, 16
      %v835 = vrot.slane %v833, 4
      %v836 = vshll.u32 %v804, 16
      %v838 = vrot.slane %v836, 5
      %v839 = vor.u32 %v835, %v838
      %v840 = vrot.slane %v839, 4
      %v842 = vshll.u32 %v805, 16
      %v844 = vrot.slane %v842, 5
      %v845 = vsel %vm286, %v840, %v844
      %v847 = vshrl.u32 %v806, 16
      %v849 = vrot.slane %v847, 4
      %v850 = vshll.u32 %v806, 16
      %v852 = vrot.slane %v850, 5
      %v853 = vor.u32 %v849, %v852
      %v854 = vrot.slane %v853, 4
      %v856 = vshll.u32 %v807, 16
      %v858 = vrot.slane %v856, 5
      %v859 = vsel %vm286, %v854, %v858
      %v861 = vshrl.u32 %v808, 16
      %v863 = vrot.slane %v861, 4
      %v864 = vshll.u32 %v808, 16
      %v866 = vrot.slane %v864, 5
      %v867 = vor.u32 %v863, %v866
      %v868 = vrot.slane %v867, 4
      %v870 = vshll.u32 %v809, 16
      %v872 = vrot.slane %v870, 5
      %v873 = vsel %vm286, %v868, %v872
      %v875 = vshrl.u32 %v810, 16
      %v877 = vrot.slane %v875, 4
      %v878 = vshll.u32 %v810, 16
      %v880 = vrot.slane %v878, 5
      %v881 = vor.u32 %v877, %v880
      %v882 = vrot.slane %v881, 4
      %v884 = vshll.u32 %v811, 16
      %v886 = vrot.slane %v884, 5
      %v887 = vsel %vm286, %v882, %v886
      %v889 = vshrl.u32 %v812, 16
      %v891 = vrot.slane %v889, 4
      %v892 = vshll.u32 %v812, 16
      %v894 = vrot.slane %v892, 5
      %v895 = vor.u32 %v891, %v894
      %v896 = vrot.slane %v895, 4
      %v898 = vshll.u32 %v813, 16
      %v900 = vrot.slane %v898, 5
      %v901 = vsel %vm286, %v896, %v900
      %v903 = vshrl.u32 %v814, 16
      %v905 = vrot.slane %v903, 4
      %v906 = vshll.u32 %v814, 16
      %v908 = vrot.slane %v906, 5
      %v909 = vor.u32 %v905, %v908
      %v910 = vrot.slane %v909, 4
      %v912 = vshll.u32 %v815, 16
      %v914 = vrot.slane %v912, 5
      %v915 = vsel %vm286, %v910, %v914
      %v917 = vshrl.u32 %v816, 16
      %v919 = vrot.slane %v917, 4
      %v920 = vshll.u32 %v816, 16
      %v922 = vrot.slane %v920, 5
      %v923 = vor.u32 %v919, %v922
      %v924 = vrot.slane %v923, 4
      %v926 = vshll.u32 %v817, 16
      %v928 = vrot.slane %v926, 5
      %v929 = vsel %vm286, %v924, %v928
      %930 = vrot.lane.b32.xlu0 %v831, 32
      %v931 = vpop.permute.xlu0 %930
      %932 = vrot.lane.b32.xlu0 %v845, 32
      %v933 = vpop.permute.xlu0 %932
      %934 = vrot.lane.b32.xlu0 %v859, 32
      %v935 = vpop.permute.xlu0 %934
      %936 = vrot.lane.b32.xlu0 %v873, 32
      %v937 = vpop.permute.xlu0 %936
      %938 = vrot.lane.b32.xlu0 %v887, 32
      %v939 = vpop.permute.xlu0 %938
      %940 = vrot.lane.b32.xlu0 %v901, 32
      %v941 = vpop.permute.xlu0 %940
      %942 = vrot.lane.b32.xlu0 %v915, 32
      %v943 = vpop.permute.xlu0 %942
      %944 = vrot.lane.b32.xlu0 %v929, 32
      %v945 = vpop.permute.xlu0 %944
      %vm954 = vcmask 290048
      %955 = vst.msk [vmem:[#allocation2] sm:$0xf] %vm954, %v931
      %956 = vst.msk [vmem:[#allocation2 + $0x4] sm:$0xf] %vm954, %v933
      %957 = vst.msk [vmem:[#allocation2 + $0x8] sm:$0xf] %vm954, %v935
      %958 = vst.msk [vmem:[#allocation2 + $0xc] sm:$0xf] %vm954, %v937
      %959 = vst.msk [vmem:[#allocation2 + $0x10] sm:$0xf] %vm954, %v939
      %960 = vst.msk [vmem:[#allocation2 + $0x14] sm:$0xf] %vm954, %v941
      %961 = vst.msk [vmem:[#allocation2 + $0x18] sm:$0xf] %vm954, %v943
      %962 = vst.msk [vmem:[#allocation2 + $0x1c] sm:$0xf] %vm954, %v945
      %v963 = vld [vmem:[#allocation2] sm:$0xf]
      %v964 = vld [vmem:[#allocation2 + $0x4] sm:$0xf]
      %v965 = vld [vmem:[#allocation2 + $0x8] sm:$0xf]
      %v966 = vld [vmem:[#allocation2 + $0xc] sm:$0xf]
      %v967 = vld [vmem:[#allocation2 + $0x10] sm:$0xf]
      %v968 = vld [vmem:[#allocation2 + $0x14] sm:$0xf]
      %v969 = vld [vmem:[#allocation2 + $0x18] sm:$0xf]
      %v970 = vld [vmem:[#allocation2 + $0x1c] sm:$0xf]
      %v971 = vld [vmem:[%s1] sm:$0xf]
      %v972 = vld [vmem:[%s1 + $0x4] sm:$0xf]
      %v973 = vld [vmem:[%s1 + $0x8] sm:$0xf]
      %v974 = vld [vmem:[%s1 + $0xc] sm:$0xf]
      %v975 = vld [vmem:[%s1 + $0x10] sm:$0x3]
      %v976 = vld [vmem:[%s2] sm:$0x1]
      %v978 = vperm.slane %v976, 0
      %v988 = vunpack.c.l.b16 %v963
      %v989 = vunpack.c.l.b16 %v964
      %v990 = vunpack.c.l.b16 %v965
      %v991 = vunpack.c.l.b16 %v966
      %v992 = vunpack.c.l.b16 %v967
      %v993 = vunpack.c.l.b16 %v968
      %v994 = vunpack.c.l.b16 %v969
      %v995 = vunpack.c.l.b16 %v970
      %v996 = vpack.c.b16 %v989, %v988
      %v997 = vpack.c.b16 %v991, %v990
      %v998 = vpack.c.b16 %v993, %v992
      %v999 = vpack.c.b16 %v995, %v994
      %v1005 = vunpack.c.l.b16 %v971
      %v1006 = vunpack.c.l.b16 %v972
      %v1007 = vunpack.c.l.b16 %v973
      %v1008 = vunpack.c.l.b16 %v974
      %v1009 = vunpack.c.l.b16 %v975
      %v1010 = vpack.c.b16 %v1006, %v1005
      %v1011 = vpack.c.b16 %v1008, %v1007
      %v1012 = vpack.c.b16 %v1009, %v1009
      %vm1015 = vcmask 293888
      %v1017 = vsel %vm1015, %v996, 0
      %v1020 = vsel %vm1015, %v997, 0
      %v1023 = vsel %vm1015, %v998, 0
      %v1026 = vsel %vm1015, %v999, 0
      %vm1028 = vcmask 1041408
      %v1030 = vsel %vm1028, %v1012, 0
      %1032 = vmatpush.bf16.msra.mxu0 0
      %1033 = vmatpush.bf16.msra.mxu0 0
      %1034 = vmatpush.bf16.msra.mxu0 0
      %1035 = vmatpush.bf16.msra.mxu0 0
      %1036 = vmatpush.bf16.msra.mxu0 0
      %1037 = vmatpush.bf16.msra.mxu0 %v1030
      %1038 = vmatpush.bf16.msra.mxu0 %v1011
      %1039 = vmatpush.bf16.msra.mxu0 %v1010
      %1040 = vmatmul.bf16.gmra.mxu0 %v1017
      %v1041 = vpop.f32.mrf.mxu0
      %v1042 = vadd.f32 %v978, %v1041
      %v1043 = vpop.f32.mrf.mxu0
      %v1044 = vadd.f32 %v978, %v1043
      %1045 = vmatmul.bf16.gmra.mxu0 %v1020
      %v1046 = vpop.f32.mrf.mxu0
      %v1047 = vadd.f32 %v978, %v1046
      %v1048 = vpop.f32.mrf.mxu0
      %v1049 = vadd.f32 %v978, %v1048
      %1050 = vmatmul.bf16.gmra.mxu0 %v1023
      %v1051 = vpop.f32.mrf.mxu0
      %v1052 = vadd.f32 %v978, %v1051
      %v1053 = vpop.f32.mrf.mxu0
      %v1054 = vadd.f32 %v978, %v1053
      %1055 = vmatmul.bf16.gmra.mxu0 %v1026
      %v1056 = vpop.f32.mrf.mxu0
      %v1057 = vadd.f32 %v978, %v1056
      %v1058 = vpop.f32.mrf.mxu0
      %v1059 = vadd.f32 %v978, %v1058
      %1060 = vdwg.mxu0
      %v1061 = vmax.f32 %v1042, 0.0
      %v1062 = vmax.f32 %v1044, 0.0
      %v1063 = vmax.f32 %v1047, 0.0
      %v1064 = vmax.f32 %v1049, 0.0
      %v1065 = vmax.f32 %v1052, 0.0
      %v1066 = vmax.f32 %v1054, 0.0
      %v1067 = vmax.f32 %v1057, 0.0
      %v1068 = vmax.f32 %v1059, 0.0
      %v1069 = vmin.f32 %v1061, 6.0
      %v1070 = vmin.f32 %v1062, 6.0
      %v1071 = vmin.f32 %v1063, 6.0
      %v1072 = vmin.f32 %v1064, 6.0
      %v1073 = vmin.f32 %v1065, 6.0
      %v1074 = vmin.f32 %v1066, 6.0
      %v1075 = vmin.f32 %v1067, 6.0
      %v1076 = vmin.f32 %v1068, 6.0
      %v1077 = vpack.c.bf16 %v1069, %v1069
      %v1078 = vpack.c.bf16 %v1070, %v1070
      %v1079 = vpack.c.bf16 %v1071, %v1071
      %v1080 = vpack.c.bf16 %v1072, %v1072
      %v1081 = vpack.c.bf16 %v1073, %v1073
      %v1082 = vpack.c.bf16 %v1074, %v1074
      %v1083 = vpack.c.bf16 %v1075, %v1075
      %v1084 = vpack.c.bf16 %v1076, %v1076
      %vm1085 = vcmask 60416
      %1086 = vst.msk [vmem:[%s192] sm:$0xf] %vm1085, %v1077
      %1087 = vst.msk [vmem:[%s192 + $0x4] sm:$0xf] %vm1085, %v1078
      %1088 = vst.msk [vmem:[%s192 + $0x8] sm:$0xf] %vm1085, %v1079
      %1089 = vst.msk [vmem:[%s192 + $0xc] sm:$0xf] %vm1085, %v1080
      %1090 = vst.msk [vmem:[%s192 + $0x10] sm:$0xf] %vm1085, %v1081
      %1091 = vst.msk [vmem:[%s192 + $0x14] sm:$0xf] %vm1085, %v1082
      %1092 = vst.msk [vmem:[%s192 + $0x18] sm:$0xf] %vm1085, %v1083
      %1093 = vst.msk [vmem:[%s192 + $0x1c] sm:$0xf] %vm1085, %v1084
      %s1094 = smul.u32 8, %s19
      %p1095 = scmp.lt.s32.totalorder %s18, 1
      %s1096 = scalar_select %p1095, %s18, 1
      %p1097 = scmp.lt.s32.totalorder %s1094, 7
      %s1098 = scalar_select %p1097, %s1094, 7
      %s1099 = smul.addr %s1096, 8
      %s1100 = sadd.s32 %s1098, %s1099
      %s1101 = smul.addr %s1100, 4
      %s1102 = scalar_lea.vmem %s3, %s1101
      // Predicated region
      $region33: #{conv_bn_relu6.1} parent=31 // pred_check
        %p1103 = pneg %p114
      $region34: #{conv_bn_relu6.1} parent=31 // pred_check_branch
        %1105 = sbr.rel (%p1103) target = $region36
      $region35: #{conv_bn_relu6.1} parent=31 // pred_region
        %s1106 = smul.u32 8, %s19
      $region36: #{conv_bn_relu6.1} parent=31 // pred_fallthru
        _
    $region32: #{conv_bn_relu6.1} parent=5 // pred_fallthru
      _
    %p1107 = scmp.le.s32.totalorder 2, %s9
    // Predicated region
    $region37: #{conv_bn_relu6.1} parent=5 // pred_check
      %p1108 = pneg %p1107
    $region38: #{conv_bn_relu6.1} parent=5 // pred_check_branch
      %1110 = sbr.rel (%p1108) target = $region40
    $region39: #{conv_bn_relu6.1} parent=5 // pred_region
      %s1111 = ssub.s32 %s9, 2
      // Predicated region
      $region41: #{conv_bn_relu6.1} parent=39 // pred_check
        %p1112 = pneg %p120
      $region42: #{conv_bn_relu6.1} parent=39 // pred_check_branch
        %1114 = sbr.rel (%p1112) target = $region44
      $region43: #{conv_bn_relu6.1} parent=39 // pred_region
        %s1115 = smul.u32 8, %s21
        %p1116 = scmp.lt.s32.totalorder %s20, 1
        %s1117 = scalar_select %p1116, %s20, 1
        %p1118 = scmp.lt.s32.totalorder %s1115, 7
        %s1119 = scalar_select %p1118, %s1115, 7
        %s1120 = smul.addr %s1117, 8
        %s1121 = sadd.s32 %s1119, %s1120
        %s1122 = smul.addr %s1121, 4
        %s1123 = scalar_lea.vmem %s3, %s1122
      $region44: #{conv_bn_relu6.1} parent=39 // pred_fallthru
        _
    $region40: #{conv_bn_relu6.1} parent=5 // pred_fallthru
      _
  $region6: #{conv_bn_relu6.1} parent=0 // loop_footer
    %s13 = sadd.s32 1, %s9
  $region7: #{conv_bn_relu6.1} parent=0 // loop_footer_branch
    %8 = sbr.rel target = $region3
  $region8: #{conv_bn_relu6.1} parent=0 // loop_exit
    _

</llo_original>
